<compile_context>
chip_gen: v7x
topology: tpu7x:2x2x1
jax: 0.10.0
libtpu: 0.0.40
codegen_flags: <defaults>
</compile_context>

<pallas_src>
import functools

import jax
import jax.numpy as jnp
from jax.experimental import pallas as pl
from jax.experimental.pallas import tpu as pltpu


# ---------------------------------------------------------------------------
# Pallas kernel: fused (BN-folded weight) matmul + bias + ReLU.
# Output tiles are (1, Cout, tm) with the spatial axis (lane-dense) on lanes,
# written directly in the final (N, Cout, Hout*Wout) layout.
# ---------------------------------------------------------------------------
def _conv_bn_relu_kernel(w_ref, p_ref, b_ref, o_ref):
    # w_ref: (Cout, K)      bf16  conv weight with BN scale folded in
    # p_ref: (1, K, tm)     bf16  im2col patch columns for this (image, tile)
    # b_ref: (Cout, 1)      f32   folded BN bias
    # o_ref: (1, Cout, tm)        output tile (spatial on lanes)
    acc = jnp.dot(w_ref[...], p_ref[0],
                  preferred_element_type=jnp.float32)          # (Cout, tm) f32
    o_ref[0] = jnp.maximum(acc + b_ref[...], 0.0).astype(o_ref.dtype)


# ---------------------------------------------------------------------------
# Wrapper-side helpers
# ---------------------------------------------------------------------------
def _out_size(size, k, stride, padding, dilation):
    return (size + 2 * padding - dilation * (k - 1) - 1) // stride + 1


def _im2col_nkm(x, kh, kw, stride, padding, dilation, hout, wout):
    """Patch matrix (N, Cin*kh*kw, Hout*Wout), built in x's dtype (bf16 here).

    K ordering is (cin, kh, kw) to match PyTorch OIHW weight flattening; the
    last axis is row-major over (oh, ow) so it maps 1:1 onto NCHW spatial."""
    n, c, _, _ = x.shape
    xp = jnp.pad(x, ((0, 0), (0, 0), (padding, padding), (padding, padding)))
    cols = []
    for i in range(kh):
        for j in range(kw):
            cols.append(xp[:, :,
                           i * dilation: i * dilation + stride * hout: stride,
                           j * dilation: j * dilation + stride * wout: stride])
    col = jnp.stack(cols, axis=2)                  # (N, C, kh*kw, Hout, Wout)
    return col.reshape(n, c * kh * kw, hout * wout)


def _const_spec(shape):
    """BlockSpec for a grid-invariant operand; single-buffered when supported."""
    index_map = lambda b, m: (0,) * len(shape)
    try:
        return pl.BlockSpec(shape, index_map, pipeline_mode=pl.Buffered(1))
    except (TypeError, AttributeError):   # older jax without pipeline_mode
        return pl.BlockSpec(shape, index_map)


def _pick_tile_and_vmem(hw, k, cout, out_itemsize, batch):
    """Lane-tile over Hout*Wout and scoped-VMEM budget, per TPU generation."""
    try:
        kind = jax.devices()[0].device_kind.lower()
    except Exception:                      # defensive: unknown backend
        kind = ""
    single_tc = ("v5e" in kind) or ("v5 lite" in kind) or ("v6" in kind)
    # v5e/v6e: 128 MiB physical VMEM -> request a 64 MiB scoped budget.
    # v7x (or unknown): 64 MiB physical -> stay at the 32 MiB scoped default.
    vmem_limit = (64 if single_tc else 32) * 1024 * 1024

    if hw <= 128:
        return hw, vmem_limit               # full-extent (lane) block

    def fits(tm):
        # double-buffered patches + outputs, single-buffered folded weights
        used = 2 * k * tm * 2 + 2 * cout * tm * out_itemsize + cout * k * 2
        return used <= int(vmem_limit * 0.75)        # headroom for Mosaic

    cap = 2048 if single_tc else 1024
    tm = max(128, min(cap, (hw // 128) * 128))
    while tm > 128 and not fits(tm):
        tm -= 128
    if not single_tc:
        # keep >= 2 grid steps so both v7x TensorCores get work
        while tm > 128 and batch * pl.cdiv(hw, tm) < 2:
            tm = max(128, ((tm // 2) // 128) * 128)
    return tm, vmem_limit


# ---------------------------------------------------------------------------
# Public entry point
# ---------------------------------------------------------------------------
@functools.partial(
    jax.jit,
    static_argnames=("stride", "padding", "dilation", "out_dtype",
                     "xla_fallback_threshold"))
def basic_conv2d(x, weight, gamma, beta, running_mean, running_var, *,
                 stride=1, padding=0, dilation=1, eps=1e-5,
                 out_dtype=jnp.float32, xla_fallback_threshold=0):
    """Forward of BasicConv2d. x: (N, Cin, H, W) NCHW, weight: (Cout, Cin, kh, kw)."""
    cout, cin, kh, kw = weight.shape
    n = x.shape[0]
    hout = _out_size(x.shape[2], kh, stride, padding, dilation)
    wout = _out_size(x.shape[3], kw, stride, padding, dilation)
    hw = hout * wout
    k = cin * kh * kw

    # Fold BatchNorm (inference / running-stats semantics): scale into weights,
    # additive part stays as a bias.
    scale = (gamma.astype(jnp.float32)
             / jnp.sqrt(running_var.astype(jnp.float32) + eps))
    bias = beta.astype(jnp.float32) - running_mean.astype(jnp.float32) * scale

    # Tiny-problem fast path (per perf review): pallas_call launch + im2col
    # overhead dominates below ~a few hundred thousand patch elements.
    # Disabled by default so the Pallas kernel is always exercised here.
    if xla_fallback_threshold and n * hw * k < xla_fallback_threshold:
        y = jax.lax.conv_general_dilated(
            x.astype(jnp.float32), weight.astype(jnp.float32),
            window_strides=(stride, stride),
            padding=[(padding, padding), (padding, padding)],
            rhs_dilation=(dilation, dilation),
            dimension_numbers=("NCHW", "OIHW", "NCHW"))
        y = y * scale[None, :, None, None] + bias[None, :, None, None]
        return jnp.maximum(y, 0.0).astype(out_dtype)

    # im2col built directly in bf16, already laid out as (N, K, Hout*Wout).
    patches = _im2col_nkm(x.astype(jnp.bfloat16), kh, kw,
                          stride, padding, dilation, hout, wout)

    w_folded = (weight.reshape(cout, k).astype(jnp.float32)
                * scale[:, None]).astype(jnp.bfloat16)           # (Cout, K)
    bias2d = bias.reshape(cout, 1)                               # (Cout, 1) f32

    out_itemsize = jnp.dtype(out_dtype).itemsize
    tm, vmem_limit = _pick_tile_and_vmem(hw, k, cout, out_itemsize, n)
    grid_m = pl.cdiv(hw, tm)     # partial last block (if any) is masked by Pallas

    cost = pl.CostEstimate(
        flops=2 * n * hw * k * cout,
        transcendentals=0,
        bytes_accessed=(n * k * hw * 2 + cout * k * 2 + cout * 4
                        + n * cout * hw * out_itemsize),
    )

    out_flat = pl.pallas_call(
        _conv_bn_relu_kernel,
        out_shape=jax.ShapeDtypeStruct((n, cout, hw), out_dtype),
        grid_spec=pltpu.PrefetchScalarGridSpec(
            num_scalar_prefetch=0,
            grid=(n, grid_m),
            in_specs=[
                _const_spec((cout, k)),                              # weights
                pl.BlockSpec((1, k, tm), lambda b, m: (b, 0, m)),    # patches
                _const_spec((cout, 1)),                              # bias
            ],
            out_specs=pl.BlockSpec((1, cout, tm), lambda b, m: (b, 0, m)),
        ),
        compiler_params=pltpu.CompilerParams(
            dimension_semantics=("parallel", "parallel"),
            vmem_limit_bytes=vmem_limit,
        ),
        cost_estimate=cost,
    )(w_folded, patches, bias2d)

    # (N, Cout, Hout*Wout) -> (N, Cout, Hout, Wout): metadata-only reshape,
    # no relayout pass (the old transpose(1, 0, 2, 3) is gone).
    return out_flat.reshape(n, cout, hout, wout)


# ---------------------------------------------------------------------------
# Pure-JAX reference (conv + BN(inference) + ReLU) for validation
# ---------------------------------------------------------------------------
def _reference(x, weight, gamma, beta, running_mean, running_var,
               *, stride, padding, dilation, eps=1e-5):
    y = jax.lax.conv_general_dilated(
        x.astype(jnp.float32), weight.astype(jnp.float32),
        window_strides=(stride, stride),
        padding=[(padding, padding), (padding, padding)],
        rhs_dilation=(dilation, dilation),
        dimension_numbers=("NCHW", "OIHW", "NCHW"))
    scale = gamma / jnp.sqrt(running_var + eps)
    bias = beta - running_mean * scale
    y = y * scale[None, :, None, None] + bias[None, :, None, None]
    return jnp.maximum(y, 0.0)


if __name__ == "__main__":
    # Module config: BasicConv2d(in_planes=4, out_planes=8, kernel_size=3,
    #                            stride=1, padding=1, dilation=1)
    in_planes, out_planes, ksize = 4, 8, 3
    stride, padding, dilation = 1, 1, 1

    key = jax.random.PRNGKey(0)
    kx, kw_, kg, kb, km, kv = jax.random.split(key, 6)

    x = jax.random.normal(kx, (2, in_planes, 16, 16), dtype=jnp.float32)
    weight = jax.random.normal(kw_, (out_planes, in_planes, ksize, ksize),
                               dtype=jnp.float32) * 0.1
    gamma = 1.0 + 0.1 * jax.random.normal(kg, (out_planes,), dtype=jnp.float32)
    beta = 0.1 * jax.random.normal(kb, (out_planes,), dtype=jnp.float32)
    running_mean = 0.1 * jax.random.normal(km, (out_planes,), dtype=jnp.float32)
    running_var = jnp.abs(1.0 + 0.1 * jax.random.normal(
        kv, (out_planes,), dtype=jnp.float32))

    out = basic_conv2d(x, weight, gamma, beta, running_mean, running_var,
                       stride=stride, padding=padding, dilation=dilation)
    out = jax.block_until_ready(out)

    ref = _reference(x, weight, gamma, beta, running_mean, running_var,
                     stride=stride, padding=padding, dilation=dilation)
    assert out.shape == (2, out_planes, 16, 16), out.shape
    # bf16 MXU inputs (K = 36) -> loosened tolerance vs f32 reference.
    assert jnp.allclose(out, ref, atol=5e-2, rtol=5e-2), "mismatch vs reference"

    print("KERNEL_OK")
</pallas_src>

<mosaic_0001>
module attributes {stable_mosaic.version = 11 : i64} {
  func.func @_conv_bn_relu_kernel(%arg0: i32, %arg1: i32, %arg2: memref<8x36xbf16, #tpu.memory_space<vmem>>, %arg3: memref<1x36x256xbf16, #tpu.memory_space<vmem>>, %arg4: memref<8x1xf32, #tpu.memory_space<vmem>>, %arg5: memref<1x8x256xf32, #tpu.memory_space<vmem>>) attributes {dimension_semantics = [#tpu.dimension_semantics<parallel>, #tpu.dimension_semantics<parallel>], iteration_bounds = array<i64: 2, 1>, scalar_prefetch = 0 : i64, scratch_operands = 0 : i64, tpu.core_type = #tpu.core_type<tc>, window_params = [{pipeline_mode = #tpu.pipeline_mode<synchronous>, transform_indices = @transform_0, window_bounds = array<i64: 8, 36>}, {transform_indices = @transform_1, window_bounds = array<i64: 1, 36, 256>}, {pipeline_mode = #tpu.pipeline_mode<synchronous>, transform_indices = @transform_2, window_bounds = array<i64: 8, 1>}, {transform_indices = @transform_3, window_bounds = array<i64: 1, 8, 256>}]} {
    %c0 = arith.constant 0 : index
    %c0_0 = arith.constant 0 : index
    %0 = vector.load %arg2[%c0, %c0_0] : memref<8x36xbf16, #tpu.memory_space<vmem>>, vector<8x36xbf16>
    %c0_1 = arith.constant 0 : index
    %c0_2 = arith.constant 0 : index
    %c0_3 = arith.constant 0 : index
    %1 = vector.load %arg3[%c0_1, %c0_2, %c0_3] : memref<1x36x256xbf16, #tpu.memory_space<vmem>>, vector<1x36x256xbf16>
    %2 = vector.shape_cast %1 : vector<1x36x256xbf16> to vector<36x256xbf16>
    %cst = arith.constant dense<0.000000e+00> : vector<8x256xf32>
    %3 = tpu.matmul %0, %2, %cst {dimension_numbers = #tpu.dot_dimension_numbers<[1], [0], [0], [1], [0, 0, 1, 1], [], []>} : vector<8x36xbf16>, vector<36x256xbf16>, vector<8x256xf32> -> vector<8x256xf32>
    %c0_4 = arith.constant 0 : index
    %c0_5 = arith.constant 0 : index
    %4 = vector.load %arg4[%c0_4, %c0_5] : memref<8x1xf32, #tpu.memory_space<vmem>>, vector<8x1xf32>
    %5 = vector.broadcast %4 : vector<8x1xf32> to vector<8x256xf32>
    %6 = arith.addf %3, %5 : vector<8x256xf32>
    %cst_6 = arith.constant 0.000000e+00 : f32
    %7 = vector.broadcast %cst_6 : f32 to vector<8x256xf32>
    %8 = arith.maximumf %6, %7 : vector<8x256xf32>
    %c0_7 = arith.constant 0 : index
    %c0_8 = arith.constant 0 : index
    %c0_9 = arith.constant 0 : index
    %9 = vector.load %arg5[%c0_7, %c0_8, %c0_9] : memref<1x8x256xf32, #tpu.memory_space<vmem>>, vector<1x8x256xf32>
    %10 = vector.shape_cast %9 : vector<1x8x256xf32> to vector<8x256xf32>
    %11 = vector.shape_cast %8 : vector<8x256xf32> to vector<1x8x256xf32>
    tpu.vector_store %arg5[%c0_7, %c0_8, %c0_9], %11 {strides = array<i32>} : memref<1x8x256xf32, #tpu.memory_space<vmem>>, vector<1x8x256xf32>,
    return
  }
  func.func @transform_0(%arg0: i32, %arg1: i32) -> (i32, i32) {
    %c0_i32 = arith.constant 0 : i32
    %c0_i32_0 = arith.constant 0 : i32
    %c0_i32_1 = arith.constant 0 : i32
    return %c0_i32, %c0_i32_0 : i32, i32
  }
  func.func @transform_1(%arg0: i32, %arg1: i32) -> (i32, i32, i32) {
    %c0_i32 = arith.constant 0 : i32
    %c0_i32_0 = arith.constant 0 : i32
    return %arg0, %c0_i32, %arg1 : i32, i32, i32
  }
  func.func @transform_2(%arg0: i32, %arg1: i32) -> (i32, i32) {
    %c0_i32 = arith.constant 0 : i32
    %c0_i32_0 = arith.constant 0 : i32
    %c0_i32_1 = arith.constant 0 : i32
    return %c0_i32, %c0_i32_0 : i32, i32
  }
  func.func @transform_3(%arg0: i32, %arg1: i32) -> (i32, i32, i32) {
    %c0_i32 = arith.constant 0 : i32
    %c0_i32_0 = arith.constant 0 : i32
    return %arg0, %c0_i32, %arg1 : i32, i32, i32
  }
}

</mosaic_0001>

<llo_original>
// kernel: basic_conv2d.1
$region0: #{basic_conv2d.1}
  #allocation0 [shape = 'u32[]', space=smem, size = 0x4, offset = 0x4, fixed_abs, tag = 'smem constant byte address 0x4 - core index']
  #allocation1 [shape = 'u32[144,128]{1,0:T(1,128)}', space=vmem, size = 0x12000, scoped, tag = 'internal scratch']
  %s0 = inlined_call_operand.vmem [shape: bf16[8,36], index: 0, kind: input, shape index: {}]
  %s1 = inlined_call_operand.vmem [shape: bf16[2,36,256], index: 1, kind: input, shape index: {}]
  %s2 = inlined_call_operand.vmem [shape: f32[8,1], index: 2, kind: input, shape index: {}]
  %s3 = inlined_call_operand.vmem [shape: f32[2,8,256], index: 3, kind: output, shape index: {}]
  %s4 = sld [smem:[#allocation0]]
  $region45: #{basic_conv2d.1} parent=0
    _
  %s6 = ssub.s32 1, %s4
  %s7 = scalar_select 0, %s6, %s4
  loop: start=0, step=1, limit=4
  $region2: #{basic_conv2d.1} parent=0 // loop_pre_header
    _
  $region3: #{basic_conv2d.1} parent=0 // loop_header
    %s9 = sphi 0, %s13
    %p10 = scmp.ge.s32.totalorder %s9, 4
    %s16 = sphi 0, %s28
    %s17 = sphi 0, %s24
    %s18 = sphi 0, %s16
    %s19 = sphi 0, %s17
    %s20 = sphi 0, %s18
    %s21 = sphi 0, %s19
    %s29 = sphi 0, %s29
    %s31 = sphi 0, %s29
    %s32 = sphi 0, %s31
    %s46 = sphi 0, %s32
    %s54 = sphi 0, %s56
    %s57 = sphi 0, %s54
    %s58 = sphi 0, %s57
    %s74 = sphi 0, %s58
    %s78 = sphi 0, %s78
    %s80 = sphi 0, %s78
    %s81 = sphi 0, %s80
    %s95 = sphi 0, %s81
    %s103 = sphi 0, %s105
    %s106 = sphi 0, %s103
    %s107 = sphi 0, %s106
    %s123 = sphi 0, %s107
  $region4: #{basic_conv2d.1} parent=0 // loop_header_branch
    %12 = sbr.rel (%p10) target = $region8
  $region5: #{basic_conv2d.1} parent=0 // loop_body
    %s14 = ssub.s32 %s9, 1
    %s15 = ssub.s32 %s9, 2
    %s22 = sadd.s32 1, %s17
    %p23 = scmp.ge.s32.totalorder %s22, 1
    %s24 = scalar_select %p23, 0, %s22
    %s25 = sadd.s32 1, %s16
    %s26 = scalar_select %p23, %s25, %s16
    %p27 = scmp.ge.s32.totalorder %s26, 2
    %s28 = scalar_select %p27, 0, %s26
    %s30 = sadd.s32 %s29, 1
    %p33 = scmp.eq.s32.totalorder %s9, 1
    %p34 = scmp.ne.s32.totalorder %s29, %s31
    %p35 = scmp.eq.s32.totalorder %s9, 0
    %p36 = por %p34, %p35
    %p37 = scmp.ne.s32.totalorder %s29, %s31
    %p38 = scmp.eq.s32.totalorder %s14, 1
    %p39 = por %p37, %p38
    %p40 = scmp.ne.s32.totalorder %s31, %s32
    %p41 = scmp.eq.s32.totalorder %s14, 0
    %p42 = por %p40, %p41
    %p43 = scmp.ne.s32.totalorder %s31, %s32
    %p44 = scmp.eq.s32.totalorder %s15, 1
    %p45 = por %p43, %p44
    %p47 = scmp.ne.s32.totalorder %s32, %s46
    %p48 = scmp.eq.s32.totalorder %s15, 0
    %p49 = por %p47, %p48
    %s50 = ssub.s32 %s16, %s28
    %s51 = ssub.s32 %s17, %s24
    %s52 = sor.u32 %s50, %s51
    %p53 = scmp.eq.s32.totalorder %s52, 0
    %s55 = sadd.s32 %s54, 1
    %s56 = scalar_select %p53, %s54, %s55
    %p59 = pneg %p53
    %p60 = scmp.eq.s32.totalorder %s9, 1
    %p61 = por %p59, %p60
    %p62 = scmp.ne.s32.totalorder %s54, %s57
    %p63 = scmp.eq.s32.totalorder %s9, 0
    %p64 = por %p62, %p63
    %p65 = scmp.ne.s32.totalorder %s54, %s57
    %p66 = scmp.eq.s32.totalorder %s14, 1
    %p67 = por %p65, %p66
    %p68 = scmp.ne.s32.totalorder %s57, %s58
    %p69 = scmp.eq.s32.totalorder %s14, 0
    %p70 = por %p68, %p69
    %p71 = scmp.ne.s32.totalorder %s57, %s58
    %p72 = scmp.eq.s32.totalorder %s15, 1
    %p73 = por %p71, %p72
    %p75 = scmp.ne.s32.totalorder %s58, %s74
    %p76 = scmp.eq.s32.totalorder %s15, 0
    %p77 = por %p75, %p76
    %s79 = sadd.s32 %s78, 1
    %p82 = scmp.eq.s32.totalorder %s9, 1
    %p83 = scmp.ne.s32.totalorder %s78, %s80
    %p84 = scmp.eq.s32.totalorder %s9, 0
    %p85 = por %p83, %p84
    %p86 = scmp.ne.s32.totalorder %s78, %s80
    %p87 = scmp.eq.s32.totalorder %s14, 1
    %p88 = por %p86, %p87
    %p89 = scmp.ne.s32.totalorder %s80, %s81
    %p90 = scmp.eq.s32.totalorder %s14, 0
    %p91 = por %p89, %p90
    %p92 = scmp.ne.s32.totalorder %s80, %s81
    %p93 = scmp.eq.s32.totalorder %s15, 1
    %p94 = por %p92, %p93
    %p96 = scmp.ne.s32.totalorder %s81, %s95
    %p97 = scmp.eq.s32.totalorder %s15, 0
    %p98 = por %p96, %p97
    %s99 = ssub.s32 %s16, %s28
    %s100 = ssub.s32 %s17, %s24
    %s101 = sor.u32 %s99, %s100
    %p102 = scmp.eq.s32.totalorder %s101, 0
    %s104 = sadd.s32 %s103, 1
    %s105 = scalar_select %p102, %s103, %s104
    %p108 = pneg %p102
    %p109 = scmp.eq.s32.totalorder %s9, 1
    %p110 = por %p108, %p109
    %p111 = scmp.ne.s32.totalorder %s103, %s106
    %p112 = scmp.eq.s32.totalorder %s9, 0
    %p113 = por %p111, %p112
    %p114 = scmp.ne.s32.totalorder %s103, %s106
    %p115 = scmp.eq.s32.totalorder %s14, 1
    %p116 = por %p114, %p115
    %p117 = scmp.ne.s32.totalorder %s106, %s107
    %p118 = scmp.eq.s32.totalorder %s14, 0
    %p119 = por %p117, %p118
    %p120 = scmp.ne.s32.totalorder %s106, %s107
    %p121 = scmp.eq.s32.totalorder %s15, 1
    %p122 = por %p120, %p121
    %p124 = scmp.ne.s32.totalorder %s107, %s123
    %p125 = scmp.eq.s32.totalorder %s15, 0
    %p126 = por %p124, %p125
    %p127 = scmp.le.s32.totalorder 1, %s9
    %p128 = scmp.lt.s32.totalorder %s9, 3
    %p129 = pnand %p127, %p128
    %p130 = pneg %p129
    // Predicated region
    $region9: #{basic_conv2d.1} parent=5 // pred_check
      _
    $region10: #{basic_conv2d.1} parent=5 // pred_check_branch
      %132 = sbr.rel (%p129) target = $region12
    $region11: #{basic_conv2d.1} parent=5 // pred_region
      %s133 = ssub.s32 %s9, 1
      // Predicated region
      $region13: #{basic_conv2d.1} parent=11 // pred_check
        %p134 = pneg %p42
      $region14: #{basic_conv2d.1} parent=11 // pred_check_branch
        %136 = sbr.rel (%p134) target = $region16
      $region15: #{basic_conv2d.1} parent=11 // pred_region
        _
      $region16: #{basic_conv2d.1} parent=11 // pred_fallthru
        _
      // Predicated region
      $region17: #{basic_conv2d.1} parent=11 // pred_check
        %p137 = pneg %p91
      $region18: #{basic_conv2d.1} parent=11 // pred_check_branch
        %139 = sbr.rel (%p137) target = $region20
      $region19: #{basic_conv2d.1} parent=11 // pred_region
        _
      $region20: #{basic_conv2d.1} parent=11 // pred_fallthru
        _
    $region12: #{basic_conv2d.1} parent=5 // pred_fallthru
      _
    %p140 = scmp.lt.s32.totalorder %s9, 2
    // Predicated region
    $region21: #{basic_conv2d.1} parent=5 // pred_check
      %p141 = pneg %p140
    $region22: #{basic_conv2d.1} parent=5 // pred_check_branch
      %143 = sbr.rel (%p141) target = $region24
    $region23: #{basic_conv2d.1} parent=5 // pred_region
      // Predicated region
      $region25: #{basic_conv2d.1} parent=23 // pred_check
        %p144 = pneg %p64
      $region26: #{basic_conv2d.1} parent=23 // pred_check_branch
        %146 = sbr.rel (%p144) target = $region28
      $region27: #{basic_conv2d.1} parent=23 // pred_region
        %s147 = smul.u32 2, %s17
        %p148 = scmp.lt.s32.totalorder %s16, 1
        %s149 = scalar_select %p148, %s16, 1
        %p150 = scmp.lt.s32.totalorder %s147, 1
        %s151 = scalar_select %p150, %s147, 1
        %s152 = smul.addr %s149, 10
        %s153 = sadd.s32 %s151, %s152
        %s154 = smul.addr %s153, 4
        %s155 = scalar_lea.vmem %s1, %s154
        %s156 = smul.u32 2, %s17
      $region28: #{basic_conv2d.1} parent=23 // pred_fallthru
        _
    $region24: #{basic_conv2d.1} parent=5 // pred_fallthru
      _
    %p157 = scmp.le.s32.totalorder 1, %s9
    %p158 = scmp.lt.s32.totalorder %s9, 3
    %p159 = pnand %p157, %p158
    %p160 = pneg %p159
    // Predicated region
    $region29: #{basic_conv2d.1} parent=5 // pred_check
      _
    $region30: #{basic_conv2d.1} parent=5 // pred_check_branch
      %162 = sbr.rel (%p159) target = $region32
    $region31: #{basic_conv2d.1} parent=5 // pred_region
      %s163 = ssub.s32 %s9, 1
      %p164 = pneg %p42
      %p165 = pneg %p39
      %s166 = smul.u32 2, %s19
      %p167 = scmp.lt.s32.totalorder %s18, 1
      %s168 = scalar_select %p167, %s18, 1
      %p169 = scmp.lt.s32.totalorder %s166, 1
      %s170 = scalar_select %p169, %s166, 1
      %s171 = smul.addr %s168, 10
      %s172 = sadd.s32 %s170, %s171
      %s173 = smul.addr %s172, 4
      %s174 = scalar_lea.vmem %s1, %s173
      %p175 = pneg %p70
      %p176 = pneg %p67
      %p177 = pneg %p91
      %p178 = pneg %p88
      %p179 = pneg %p119
      %p180 = pneg %p116
      %s181 = smul.u32 2, %s19
      %p182 = scmp.lt.s32.totalorder %s18, 1
      %s183 = scalar_select %p182, %s18, 1
      %p184 = scmp.lt.s32.totalorder %s181, 1
      %s185 = scalar_select %p184, %s181, 1
      %s186 = smul.addr %s183, 2
      %s187 = sadd.s32 %s185, %s186
      %s188 = smul.addr %s187, 8
      %s189 = scalar_lea.vmem %s3, %s188
      %s190 = smul.u32 2, %s19
      %p191 = scmp.lt.s32.totalorder %s18, 1
      %s192 = scalar_select %p191, %s18, 1
      %p193 = scmp.lt.s32.totalorder %s190, 1
      %s194 = scalar_select %p193, %s190, 1
      %s195 = smul.addr %s192, 10
      %s196 = sadd.s32 %s194, %s195
      %s197 = smul.addr %s196, 4
      %s198 = scalar_lea.vmem %s1, %s197
      %s199 = smul.u32 2, %s19
      %s200 = smul.u32 2, %s19
      %p201 = scmp.lt.s32.totalorder %s18, 1
      %s202 = scalar_select %p201, %s18, 1
      %p203 = scmp.lt.s32.totalorder %s200, 1
      %s204 = scalar_select %p203, %s200, 1
      %s205 = smul.addr %s202, 2
      %s206 = sadd.s32 %s204, %s205
      %s207 = smul.addr %s206, 8
      %s208 = scalar_lea.vmem %s3, %s207
      %s209 = smul.u32 2, %s19
      %v211 = vld [vmem:[%s0] sm:$0xf]
      %v212 = vld [vmem:[%s198] sm:$0xff]
      %v213 = vld [vmem:[%s198 + $0x8] sm:$0xff]
      %v214 = vld [vmem:[%s198 + $0x10] sm:$0xff]
      %v215 = vld [vmem:[%s198 + $0x18] sm:$0xff]
      %v216 = vld [vmem:[%s198 + $0x20] sm:$0x33]
      %v217 = vld [vmem:[%s2] sm:$0xff]
      %219 = vset.pattern.permute.xlu0 0
      %220 = vperm.xlu0 %219, %v217
      %v221 = vpop.permute.xlu0 %220
      %v228 = vunpack.c.l.b16 %v212
      %v229 = vunpack.c.h.b16 %v212
      %v230 = vunpack.c.l.b16 %v213
      %v231 = vunpack.c.h.b16 %v213
      %v232 = vunpack.c.l.b16 %v214
      %v233 = vunpack.c.h.b16 %v214
      %v234 = vunpack.c.l.b16 %v215
      %v235 = vunpack.c.h.b16 %v215
      %v236 = vunpack.c.l.b16 %v216
      %v237 = vunpack.c.h.b16 %v216
      %v238 = vpack.c.b16 %v230, %v228
      %v239 = vpack.c.b16 %v231, %v229
      %v240 = vpack.c.b16 %v234, %v232
      %v241 = vpack.c.b16 %v235, %v233
      %v242 = vpack.c.b16 %v236, %v236
      %v243 = vpack.c.b16 %v237, %v237
      %vm248 = vcmask 293888
      %v250 = vsel %vm248, %v211, 0
      %vm252 = vcmask 1041408
      %v254 = vsel %vm252, %v242, 0
      %v257 = vsel %vm252, %v243, 0
      %259 = vmatprep.subr.bf16.mxu0 %v239
      %260 = vmatpush1.bf16.msra.mxu0 %v238
      %261 = vmatprep.subr.bf16.mxu0 %v241
      %262 = vmatpush1.bf16.msra.mxu0 %v240
      %263 = vmatprep.subr.bf16.mxu0 %v257
      %264 = vmatpush1.bf16.msra.mxu0 %v254
      %265 = vmatprep.subr.bf16.mxu0 0
      %266 = vmatpush1.bf16.msra.mxu0 0
      %267 = vmatprep.subr.bf16.mxu0 0
      %268 = vmatpush1.bf16.msra.mxu0 0
      %269 = vmatprep.subr.bf16.mxu0 0
      %270 = vmatpush1.bf16.msra.mxu0 0
      %271 = vmatprep.subr.bf16.mxu0 0
      %272 = vmatpush1.bf16.msra.mxu0 0
      %273 = vmatprep.subr.bf16.mxu0 0
      %274 = vmatpush1.bf16.msra.mxu0 0
      %275 = vmatprep.subr.bf16.mxu0 0
      %276 = vmatpush1.bf16.msra.mxu0 0
      %277 = vmatprep.subr.bf16.mxu0 0
      %278 = vmatpush1.bf16.msra.mxu0 0
      %279 = vmatprep.subr.bf16.mxu0 0
      %280 = vmatpush1.bf16.msra.mxu0 0
      %281 = vmatprep.subr.bf16.mxu0 0
      %282 = vmatpush1.bf16.msra.mxu0 0
      %283 = vmatprep.subr.bf16.mxu0 0
      %284 = vmatpush1.bf16.msra.mxu0 0
      %285 = vmatprep.subr.bf16.mxu0 0
      %286 = vmatpush1.bf16.msra.mxu0 0
      %287 = vmatprep.subr.bf16.mxu0 0
      %288 = vmatpush1.bf16.msra.mxu0 0
      %289 = vmatprep.subr.bf16.mxu0 0
      %290 = vmatpush1.bf16.msra.mxu0 0
      %291 = vmatprep.mubr.bf16.mxu0 0
      %292 = vmatmul.mubr.bf16.gmra.mrb[0].mxu0 %v250
      %v293 = vpop.f32.mrb[0].mxu0
      %v294 = vadd.f32 %v221, %v293
      %v295 = vpop.f32.mrb[0].mxu0
      %v296 = vadd.f32 %v221, %v295
      %v297 = vpop.f32.mrb[0].mxu0
      %v298 = vpop.f32.mrb[0].mxu0
      %299 = vdwg.mxu0
      %v300 = vmax.f32 %v294, 0.0
      %v301 = vmax.f32 %v296, 0.0
      %302 = vst [vmem:[%s208] sm:$0xff] %v300
      %303 = vst [vmem:[%s208 + $0x8] sm:$0xff] %v301
      %s304 = smul.u32 2, %s19
      %p305 = scmp.lt.s32.totalorder %s18, 1
      %s306 = scalar_select %p305, %s18, 1
      %p307 = scmp.lt.s32.totalorder %s304, 1
      %s308 = scalar_select %p307, %s304, 1
      %s309 = smul.addr %s306, 2
      %s310 = sadd.s32 %s308, %s309
      %s311 = smul.addr %s310, 8
      %s312 = scalar_lea.vmem %s3, %s311
      // Predicated region
      $region33: #{basic_conv2d.1} parent=31 // pred_check
        %p313 = pneg %p116
      $region34: #{basic_conv2d.1} parent=31 // pred_check_branch
        %315 = sbr.rel (%p313) target = $region36
      $region35: #{basic_conv2d.1} parent=31 // pred_region
        %s316 = smul.u32 2, %s19
      $region36: #{basic_conv2d.1} parent=31 // pred_fallthru
        _
    $region32: #{basic_conv2d.1} parent=5 // pred_fallthru
      _
    %p317 = scmp.le.s32.totalorder 2, %s9
    // Predicated region
    $region37: #{basic_conv2d.1} parent=5 // pred_check
      %p318 = pneg %p317
    $region38: #{basic_conv2d.1} parent=5 // pred_check_branch
      %320 = sbr.rel (%p318) target = $region40
    $region39: #{basic_conv2d.1} parent=5 // pred_region
      %s321 = ssub.s32 %s9, 2
      // Predicated region
      $region41: #{basic_conv2d.1} parent=39 // pred_check
        %p322 = pneg %p122
      $region42: #{basic_conv2d.1} parent=39 // pred_check_branch
        %324 = sbr.rel (%p322) target = $region44
      $region43: #{basic_conv2d.1} parent=39 // pred_region
        %s325 = smul.u32 2, %s21
        %p326 = scmp.lt.s32.totalorder %s20, 1
        %s327 = scalar_select %p326, %s20, 1
        %p328 = scmp.lt.s32.totalorder %s325, 1
        %s329 = scalar_select %p328, %s325, 1
        %s330 = smul.addr %s327, 2
        %s331 = sadd.s32 %s329, %s330
        %s332 = smul.addr %s331, 8
        %s333 = scalar_lea.vmem %s3, %s332
      $region44: #{basic_conv2d.1} parent=39 // pred_fallthru
        _
    $region40: #{basic_conv2d.1} parent=5 // pred_fallthru
      _
  $region6: #{basic_conv2d.1} parent=0 // loop_footer
    %s13 = sadd.s32 1, %s9
  $region7: #{basic_conv2d.1} parent=0 // loop_footer_branch
    %8 = sbr.rel target = $region3
  $region8: #{basic_conv2d.1} parent=0 // loop_exit
    _

</llo_original>
